<compile_context>
chip_gen: v5e
topology: v5e:2x2
jax: 0.10.0
libtpu: 0.0.40
codegen_flags: <defaults>
</compile_context>

<pallas_src>
import math

import jax
import jax.numpy as jnp
from jax.experimental import pallas as pl
from jax.experimental.pallas import tpu as pltpu


_ATTN_MASK_FILL = -1e9     # finite fill: fully-masked row -> uniform weights, no NaN
_MAP_MASK_FILL = -1e10     # matches the PyTorch module's -10000000000.0


def _make_local_mha_kernel(num_heads, block_b, seq_len, embed_dim, per_batch_mask):
    H = num_heads
    Bb = block_b
    T = seq_len
    C = embed_dim
    D = C // H

    def kernel(x_ref, wqkv_ref, bqkv_ref, wo_ref, bo_ref, mask_ref, mmask_ref,
               out_ref, hs_ref, s_scr, ctx_scr):
        # ---------------- fused QKV projection ------------------------------------
        # Fold the Bb batch elements into sublanes: ONE (Bb*T, C)@(C, 3C) bf16 MXU
        # pass per grid step (f32 accumulation).  1/sqrt(D) is already folded into
        # the q columns of W_qkv / b_qkv in the wrapper.
        x2 = x_ref[...].reshape(Bb * T, C)                       # bf16
        qkv = jnp.dot(x2, wqkv_ref[...],
                      preferred_element_type=jnp.float32) + bqkv_ref[...]
        q16 = qkv[:, 0 * C:1 * C].astype(jnp.bfloat16)
        k16 = qkv[:, 1 * C:2 * C].astype(jnp.bfloat16)
        v16 = qkv[:, 2 * C:3 * C].astype(jnp.bfloat16)

        # Additive attention-mask bias (int8 -> f32).  When the mask is
        # batch-invariant it is computed once per step (and its block is DMA'd only
        # once for the whole grid thanks to the constant index_map).
        if per_batch_mask:
            get_bias = lambda b: mask_ref[b].astype(jnp.float32) * _ATTN_MASK_FILL
        else:
            shared_bias = mask_ref[0].astype(jnp.float32) * _ATTN_MASK_FILL
            get_bias = lambda b: shared_bias

        # ---- per-(batch, head) scores -> VMEM slab (no jnp.stack relayout) --------
        for b in range(Bb):
            bias = get_bias(b)
            for h in range(H):
                qh = q16[b * T:(b + 1) * T, h * D:(h + 1) * D]
                kh = k16[b * T:(b + 1) * T, h * D:(h + 1) * D]
                r0 = (b * H + h) * T
                s_scr[r0:r0 + T, :] = jax.lax.dot_general(
                    qh, kh, (((1,), (1,)), ((), ())),
                    preferred_element_type=jnp.float32) + bias

        # ---- ONE masked-softmax pass over the whole (Bb*H*T, T) slab --------------
        # TODO(synk): key-tile this (flash-style online softmax) for production T.
        s = s_scr[...]
        s = s - jnp.max(s, axis=-1, keepdims=True)
        e = jnp.exp(s)
        p = e * pl.reciprocal(jnp.sum(e, axis=-1, keepdims=True), approx=True)

        # ---- contexts -> (Bb*T, C) slab (no jnp.concatenate), ONE output matmul ---
        for b in range(Bb):
            for h in range(H):
                r0 = (b * H + h) * T
                ph = p[r0:r0 + T, :].astype(jnp.bfloat16)
                vh = v16[b * T:(b + 1) * T, h * D:(h + 1) * D]
                ctx_scr[b * T:(b + 1) * T, h * D:(h + 1) * D] = jnp.dot(
                    ph, vh, preferred_element_type=jnp.float32)
        out = jnp.dot(ctx_scr[...].astype(jnp.bfloat16), wo_ref[...],
                      preferred_element_type=jnp.float32) + bo_ref[...]
        out_ref[...] = out.astype(out_ref.dtype)

        # ---- halting-score head (head-AVERAGED attention weights, like torch MHA) -
        inv_h = 1.0 / H
        for b in range(Bb):
            r0 = b * H * T
            w_sum = p[r0:r0 + T, :]
            for h in range(1, H):
                w_sum = w_sum + p[r0 + h * T:r0 + (h + 1) * T, :]
            hs_row = jnp.sum(w_sum, axis=0, keepdims=True) * inv_h       # (1, T)
            mm = mmask_ref[b]                                            # (M, T)
            z = hs_row * mm + (1.0 - mm) * _MAP_MASK_FILL
            z = z - jnp.max(z, axis=-1, keepdims=True)
            ez = jnp.exp(z)
            sm = (ez / jnp.sum(ez, axis=-1, keepdims=True)) * mm
            # Finite -1e10 fill + max-subtraction make torch's isnan guard
            # unreachable, so it is dropped (dead VPU compare+select removed).
            hs_ref[b:b + 1, :] = jnp.sum(sm, axis=0, keepdims=True)

    return kernel


def local_mha_forward(x, mask, mappingmask, params, num_heads, *,
                      block_b=None, mask_batch_invariant=False):
    """x: (T,B,C), mask: (B,T,T) bool (True = disallowed), mappingmask: (B,M,T)."""
    T, B, C = x.shape
    M = mappingmask.shape[1]
    H = num_heads
    D = C // H

    if block_b is None:
        # Largest per-step batch block that still leaves an even number (>=2) of
        # "parallel" grid steps so both v7x TensorCores get work; on single-TC
        # chips (v5e/v6e) the bigger block just amortizes per-step overhead.
        block_b = B // 2 if (B % 2 == 0 and B >= 2) else B
    assert B % block_b == 0, "block_b must divide B"
    num_blocks = B // block_b

    # ---- one-off parameter prep (outside the kernel) ------------------------------
    w_in = params["in_proj_weight"].astype(jnp.float32)     # (3C, C), rows [Wq; Wk; Wv]
    b_in = params["in_proj_bias"].astype(jnp.float32)       # (3C,)
    # Fold 1/sqrt(D) into the q rows of weight AND bias: q_scaled = x@(Wq*s)^T + bq*s.
    scale = 1.0 / math.sqrt(D)
    row_scale = jnp.concatenate(
        [jnp.full((C,), scale, jnp.float32), jnp.ones((2 * C,), jnp.float32)])
    w_qkv_t = (w_in * row_scale[:, None]).T.astype(jnp.bfloat16)        # (C, 3C)
    b_qkv = (b_in * row_scale).reshape(1, 3 * C)                        # (1, 3C) f32
    w_o_t = jnp.transpose(params["out_proj_weight"]).astype(jnp.bfloat16)   # (C, C)
    b_o = params["out_proj_bias"].reshape(1, C).astype(jnp.float32)

    # bf16 activations halve the x DMA bytes; accumulation stays f32 in-kernel.
    # The batch-major transpose is kept: with C=32 (<128) the (block_b,T,C) block of
    # the (B,T,C) view is the only layout satisfying the TPU block-shape rule.
    x_btc = jnp.transpose(x, (1, 0, 2)).astype(jnp.bfloat16)            # (B, T, C)

    # int8 mask (4x fewer HBM bytes than f32).  If batch-invariant, ship a single
    # (1,T,T) copy with a constant index_map: DMA'd once, stays VMEM-resident.
    if mask_batch_invariant:
        mask_in = mask[:1].astype(jnp.int8)
        mask_spec = pl.BlockSpec((1, T, T), lambda g: (0, 0, 0))
    else:
        mask_in = mask.astype(jnp.int8)
        mask_spec = pl.BlockSpec((block_b, T, T), lambda g: (g, 0, 0))
    mmask = mappingmask.astype(jnp.float32)

    kernel = _make_local_mha_kernel(H, block_b, T, C,
                                    per_batch_mask=not mask_batch_invariant)

    out3, hs3 = pl.pallas_call(
        kernel,
        out_shape=(jax.ShapeDtypeStruct((num_blocks, block_b * T, C), jnp.float32),
                   jax.ShapeDtypeStruct((num_blocks, block_b, T), jnp.float32)),
        grid_spec=pltpu.PrefetchScalarGridSpec(
            num_scalar_prefetch=0,
            grid=(num_blocks,),
            in_specs=[
                pl.BlockSpec((block_b, T, C), lambda g: (g, 0, 0)),    # x (bf16)
                pl.BlockSpec((C, 3 * C), lambda g: (0, 0)),            # W_qkv^T (resident)
                pl.BlockSpec((1, 3 * C), lambda g: (0, 0)),            # b_qkv
                pl.BlockSpec((C, C), lambda g: (0, 0)),                # Wo^T (resident)
                pl.BlockSpec((1, C), lambda g: (0, 0)),                # bo
                mask_spec,                                             # attn mask (int8)
                pl.BlockSpec((block_b, M, T), lambda g: (g, 0, 0)),    # mapping mask
            ],
            out_specs=[
                pl.BlockSpec((None, block_b * T, C), lambda g: (g, 0, 0)),
                pl.BlockSpec((None, block_b, T), lambda g: (g, 0, 0)),
            ],
            scratch_shapes=[
                pltpu.VMEM((block_b * H * T, T), jnp.float32),   # score slab
                pltpu.VMEM((block_b * T, C), jnp.float32),       # context slab
            ],
        ),
        compiler_params=pltpu.CompilerParams(
            dimension_semantics=("parallel",),
            # 32 MiB is safe on every generation; raise toward 64-100 MiB on v6e
            # (128 MiB physical) for large T, keep well under 64 MiB on v7x.
            vmem_limit_bytes=32 * 1024 * 1024,
        ),
    )(x_btc, w_qkv_t, b_qkv, w_o_t, b_o, mask_in, mmask)

    attn_output = out3.reshape(B, T, C).transpose(1, 0, 2)   # (T, B, C)
    haltingscore = hs3.reshape(B, T)                         # (B, T)
    return attn_output, haltingscore


def reference_forward(x, mask, mappingmask, params, num_heads):
    """Pure-JAX f32 reference for correctness checking."""
    T, B, C = x.shape
    H = num_heads
    D = C // H
    w_in, b_in = params["in_proj_weight"], params["in_proj_bias"]
    w_out, b_out = params["out_proj_weight"], params["out_proj_bias"]

    x_btc = jnp.transpose(x, (1, 0, 2))
    qkv = jnp.einsum("btc,oc->bto", x_btc, w_in) + b_in
    q, k, v = qkv[..., :C], qkv[..., C:2 * C], qkv[..., 2 * C:]

    def split(a):
        return a.reshape(B, T, H, D).transpose(0, 2, 1, 3)

    q = split(q) / math.sqrt(D)
    k = split(k)
    v = split(v)
    s = jnp.einsum("bhtd,bhsd->bhts", q, k)
    s = jnp.where(mask[:, None, :, :], -jnp.inf, s)
    p = jax.nn.softmax(s, axis=-1)
    ctx = jnp.einsum("bhts,bhsd->bhtd", p, v).transpose(0, 2, 1, 3).reshape(B, T, C)
    out = jnp.einsum("btc,oc->bto", ctx, w_out) + b_out
    attn_output = out.transpose(1, 0, 2)

    w_avg = jnp.mean(p, axis=1)                         # (B, T, T)
    hs = jnp.sum(w_avg, axis=1)[:, None, :]             # (B, 1, T)
    mm = mappingmask
    mask3 = (1.0 - mm) * _MAP_MASK_FILL
    sm = jax.nn.softmax(hs * mm + mask3, axis=-1) * mm
    sm = jnp.where(jnp.isnan(sm), jnp.zeros_like(sm), sm)
    halting = jnp.sum(sm, axis=1)                       # (B, T)
    return attn_output, halting


if __name__ == "__main__":
    # Small shapes consistent with the module: dim=32, head=4, seq=8, batch=2.
    T, B, C, H = 8, 2, 32, 4
    M = T  # mapping-mask rows

    key = jax.random.PRNGKey(0)
    kx, kw, kb, kwo, kbo, kmm = jax.random.split(key, 6)

    x = jax.random.normal(kx, (T, B, C), dtype=jnp.float32)

    params = {
        "in_proj_weight": 0.05 * jax.random.normal(kw, (3 * C, C), dtype=jnp.float32),
        "in_proj_bias": 0.05 * jax.random.normal(kb, (3 * C,), dtype=jnp.float32),
        "out_proj_weight": 0.05 * jax.random.normal(kwo, (C, C), dtype=jnp.float32),
        "out_proj_bias": 0.05 * jax.random.normal(kbo, (C,), dtype=jnp.float32),
    }

    # Causal attention mask: True = disallowed (every row keeps >=1 allowed key).
    idx = jnp.arange(T)
    causal = (idx[None, :] > idx[:, None])              # (T, T) bool
    mask = jnp.broadcast_to(causal, (B, T, T))

    # Binary mapping mask.
    mappingmask = jax.random.bernoulli(kmm, 0.5, (B, M, T)).astype(jnp.float32)

    ref_out, ref_halt = reference_forward(x, mask, mappingmask, params, H)

    # Path 1: batch-invariant mask fast path (single resident (1,T,T) int8 block).
    attn_out, halting = local_mha_forward(x, mask, mappingmask, params, H,
                                          mask_batch_invariant=True)
    attn_out = jax.block_until_ready(attn_out)
    halting = jax.block_until_ready(halting)

    # Path 2: general per-batch mask path (module semantics).
    attn_out2, halting2 = local_mha_forward(x, mask, mappingmask, params, H,
                                            mask_batch_invariant=False)
    attn_out2 = jax.block_until_ready(attn_out2)
    halting2 = jax.block_until_ready(halting2)

    assert attn_out.shape == (T, B, C) and halting.shape == (B, T)
    # Tolerance 2e-2: MXU operands are bf16 (f32 accumulation) and the attention
    # softmax uses the EUP approximate reciprocal; the f32 reference differs at
    # the ~1e-3 level, so 2e-2 leaves comfortable margin.
    assert jnp.allclose(attn_out, ref_out, rtol=2e-2, atol=2e-2)
    assert jnp.allclose(halting, ref_halt, rtol=2e-2, atol=2e-2)
    assert jnp.allclose(attn_out2, ref_out, rtol=2e-2, atol=2e-2)
    assert jnp.allclose(halting2, ref_halt, rtol=2e-2, atol=2e-2)

    print("KERNEL_OK")
</pallas_src>

<mosaic_0001>
module attributes {stable_mosaic.version = 11 : i64} {
  func.func @kernel(%arg0: i32, %arg1: memref<1x8x32xbf16, #tpu.memory_space<vmem>>, %arg2: memref<32x96xbf16, #tpu.memory_space<vmem>>, %arg3: memref<1x96xf32, #tpu.memory_space<vmem>>, %arg4: memref<32x32xbf16, #tpu.memory_space<vmem>>, %arg5: memref<1x32xf32, #tpu.memory_space<vmem>>, %arg6: memref<1x8x8xi8, #tpu.memory_space<vmem>>, %arg7: memref<1x8x8xf32, #tpu.memory_space<vmem>>, %arg8: memref<1x8x32xf32, #tpu.memory_space<vmem>>, %arg9: memref<1x1x8xf32, #tpu.memory_space<vmem>>, %arg10: memref<32x8xf32, #tpu.memory_space<vmem>>, %arg11: memref<8x32xf32, #tpu.memory_space<vmem>>) attributes {dimension_semantics = [#tpu.dimension_semantics<parallel>], iteration_bounds = array<i64: 2>, scalar_prefetch = 0 : i64, scratch_operands = 2 : i64, tpu.core_type = #tpu.core_type<tc>, window_params = [{transform_indices = @transform_0, window_bounds = array<i64: 1, 8, 32>}, {pipeline_mode = #tpu.pipeline_mode<synchronous>, transform_indices = @transform_1, window_bounds = array<i64: 32, 96>}, {pipeline_mode = #tpu.pipeline_mode<synchronous>, transform_indices = @transform_2, window_bounds = array<i64: 1, 96>}, {pipeline_mode = #tpu.pipeline_mode<synchronous>, transform_indices = @transform_3, window_bounds = array<i64: 32, 32>}, {pipeline_mode = #tpu.pipeline_mode<synchronous>, transform_indices = @transform_4, window_bounds = array<i64: 1, 32>}, {pipeline_mode = #tpu.pipeline_mode<synchronous>, transform_indices = @transform_5, window_bounds = array<i64: 1, 8, 8>}, {transform_indices = @transform_6, window_bounds = array<i64: 1, 8, 8>}, {transform_indices = @transform_7, window_bounds = array<i64: 1, 8, 32>}, {transform_indices = @transform_8, window_bounds = array<i64: 1, 1, 8>}]} {
    %c0 = arith.constant 0 : index
    %c0_0 = arith.constant 0 : index
    %c0_1 = arith.constant 0 : index
    %0 = vector.load %arg1[%c0, %c0_0, %c0_1] : memref<1x8x32xbf16, #tpu.memory_space<vmem>>, vector<1x8x32xbf16>
    %1 = vector.shape_cast %0 : vector<1x8x32xbf16> to vector<8x32xbf16>
    %c0_2 = arith.constant 0 : index
    %c0_3 = arith.constant 0 : index
    %2 = vector.load %arg2[%c0_2, %c0_3] : memref<32x96xbf16, #tpu.memory_space<vmem>>, vector<32x96xbf16>
    %cst = arith.constant dense<0.000000e+00> : vector<8x96xf32>
    %3 = tpu.matmul %1, %2, %cst {dimension_numbers = #tpu.dot_dimension_numbers<[1], [0], [0], [1], [0, 0, 1, 1], [], []>} : vector<8x32xbf16>, vector<32x96xbf16>, vector<8x96xf32> -> vector<8x96xf32>
    %c0_4 = arith.constant 0 : index
    %c0_5 = arith.constant 0 : index
    %4 = vector.load %arg3[%c0_4, %c0_5] : memref<1x96xf32, #tpu.memory_space<vmem>>, vector<1x96xf32>
    %5 = vector.broadcast %4 : vector<1x96xf32> to vector<8x96xf32>
    %6 = arith.addf %3, %5 : vector<8x96xf32>
    %7 = vector.extract_strided_slice %6 {offsets = [0, 0], sizes = [8, 32], strides = [1, 1]} : vector<8x96xf32> to vector<8x32xf32>
    %8 = arith.truncf %7 : vector<8x32xf32> to vector<8x32xbf16>
    %9 = vector.extract_strided_slice %6 {offsets = [0, 32], sizes = [8, 32], strides = [1, 1]} : vector<8x96xf32> to vector<8x32xf32>
    %10 = arith.truncf %9 : vector<8x32xf32> to vector<8x32xbf16>
    %11 = vector.extract_strided_slice %6 {offsets = [0, 64], sizes = [8, 32], strides = [1, 1]} : vector<8x96xf32> to vector<8x32xf32>
    %12 = arith.truncf %11 : vector<8x32xf32> to vector<8x32xbf16>
    %c0_6 = arith.constant 0 : index
    %c0_7 = arith.constant 0 : index
    %c0_8 = arith.constant 0 : index
    %13 = vector.load %arg6[%c0_6, %c0_7, %c0_8] : memref<1x8x8xi8, #tpu.memory_space<vmem>>, vector<1x8x8xi8>
    %14 = vector.shape_cast %13 : vector<1x8x8xi8> to vector<8x8xi8>
    %15 = arith.sitofp %14 : vector<8x8xi8> to vector<8x8xf32>
    %cst_9 = arith.constant -1.000000e+09 : f32
    %16 = vector.broadcast %cst_9 : f32 to vector<8x8xf32>
    %17 = arith.mulf %15, %16 : vector<8x8xf32>
    %18 = vector.extract_strided_slice %8 {offsets = [0, 0], sizes = [8, 8], strides = [1, 1]} : vector<8x32xbf16> to vector<8x8xbf16>
    %19 = vector.extract_strided_slice %10 {offsets = [0, 0], sizes = [8, 8], strides = [1, 1]} : vector<8x32xbf16> to vector<8x8xbf16>
    %cst_10 = arith.constant dense<0.000000e+00> : vector<8x8xf32>
    %20 = tpu.matmul %18, %19, %cst_10 {dimension_numbers = #tpu.dot_dimension_numbers<[1], [1], [0], [0], [0, 0, 1, 0], [], []>} : vector<8x8xbf16>, vector<8x8xbf16>, vector<8x8xf32> -> vector<8x8xf32>
    %21 = arith.addf %20, %17 : vector<8x8xf32>
    %c0_11 = arith.constant 0 : index
    %c0_12 = arith.constant 0 : index
    %22 = vector.load %arg10[%c0_11, %c0_12] : memref<32x8xf32, #tpu.memory_space<vmem>>, vector<8x8xf32>
    tpu.vector_store %arg10[%c0_11, %c0_12], %21 {strides = array<i32>} : memref<32x8xf32, #tpu.memory_space<vmem>>, vector<8x8xf32>,
    %23 = vector.extract_strided_slice %8 {offsets = [0, 8], sizes = [8, 8], strides = [1, 1]} : vector<8x32xbf16> to vector<8x8xbf16>
    %24 = vector.extract_strided_slice %10 {offsets = [0, 8], sizes = [8, 8], strides = [1, 1]} : vector<8x32xbf16> to vector<8x8xbf16>
    %cst_13 = arith.constant dense<0.000000e+00> : vector<8x8xf32>
    %25 = tpu.matmul %23, %24, %cst_13 {dimension_numbers = #tpu.dot_dimension_numbers<[1], [1], [0], [0], [0, 0, 1, 0], [], []>} : vector<8x8xbf16>, vector<8x8xbf16>, vector<8x8xf32> -> vector<8x8xf32>
    %26 = arith.addf %25, %17 : vector<8x8xf32>
    %c8 = arith.constant 8 : index
    %c0_14 = arith.constant 0 : index
    %27 = vector.load %arg10[%c8, %c0_14] : memref<32x8xf32, #tpu.memory_space<vmem>>, vector<8x8xf32>
    tpu.vector_store %arg10[%c8, %c0_14], %26 {strides = array<i32>} : memref<32x8xf32, #tpu.memory_space<vmem>>, vector<8x8xf32>,
    %28 = vector.extract_strided_slice %8 {offsets = [0, 16], sizes = [8, 8], strides = [1, 1]} : vector<8x32xbf16> to vector<8x8xbf16>
    %29 = vector.extract_strided_slice %10 {offsets = [0, 16], sizes = [8, 8], strides = [1, 1]} : vector<8x32xbf16> to vector<8x8xbf16>
    %cst_15 = arith.constant dense<0.000000e+00> : vector<8x8xf32>
    %30 = tpu.matmul %28, %29, %cst_15 {dimension_numbers = #tpu.dot_dimension_numbers<[1], [1], [0], [0], [0, 0, 1, 0], [], []>} : vector<8x8xbf16>, vector<8x8xbf16>, vector<8x8xf32> -> vector<8x8xf32>
    %31 = arith.addf %30, %17 : vector<8x8xf32>
    %c16 = arith.constant 16 : index
    %c0_16 = arith.constant 0 : index
    %32 = vector.load %arg10[%c16, %c0_16] : memref<32x8xf32, #tpu.memory_space<vmem>>, vector<8x8xf32>
    tpu.vector_store %arg10[%c16, %c0_16], %31 {strides = array<i32>} : memref<32x8xf32, #tpu.memory_space<vmem>>, vector<8x8xf32>,
    %33 = vector.extract_strided_slice %8 {offsets = [0, 24], sizes = [8, 8], strides = [1, 1]} : vector<8x32xbf16> to vector<8x8xbf16>
    %34 = vector.extract_strided_slice %10 {offsets = [0, 24], sizes = [8, 8], strides = [1, 1]} : vector<8x32xbf16> to vector<8x8xbf16>
    %cst_17 = arith.constant dense<0.000000e+00> : vector<8x8xf32>
    %35 = tpu.matmul %33, %34, %cst_17 {dimension_numbers = #tpu.dot_dimension_numbers<[1], [1], [0], [0], [0, 0, 1, 0], [], []>} : vector<8x8xbf16>, vector<8x8xbf16>, vector<8x8xf32> -> vector<8x8xf32>
    %36 = arith.addf %35, %17 : vector<8x8xf32>
    %c24 = arith.constant 24 : index
    %c0_18 = arith.constant 0 : index
    %37 = vector.load %arg10[%c24, %c0_18] : memref<32x8xf32, #tpu.memory_space<vmem>>, vector<8x8xf32>
    tpu.vector_store %arg10[%c24, %c0_18], %36 {strides = array<i32>} : memref<32x8xf32, #tpu.memory_space<vmem>>, vector<8x8xf32>,
    %c0_19 = arith.constant 0 : index
    %c0_20 = arith.constant 0 : index
    %38 = vector.load %arg10[%c0_19, %c0_20] : memref<32x8xf32, #tpu.memory_space<vmem>>, vector<32x8xf32>
    %cst_21 = arith.constant dense<0xFF800000> : vector<32xf32>
    %39 = vector.multi_reduction <maximumf>, %38, %cst_21 [1] : vector<32x8xf32> to vector<32xf32>
    %40 = vector.shape_cast %39 : vector<32xf32> to vector<32x1xf32>
    %41 = vector.broadcast %40 : vector<32x1xf32> to vector<32x8xf32>
    %42 = arith.subf %38, %41 : vector<32x8xf32>
    %43 = math.exp %42 : vector<32x8xf32>
    %cst_22 = arith.constant dense<0.000000e+00> : vector<32xf32>
    %44 = vector.multi_reduction <add>, %43, %cst_22 [1] : vector<32x8xf32> to vector<32xf32>
    %45 = vector.shape_cast %44 : vector<32xf32> to vector<32x1xf32>
    %46 = tpu.reciprocal %45 {approx = true} : vector<32x1xf32> -> vector<32x1xf32>
    %47 = vector.broadcast %46 : vector<32x1xf32> to vector<32x8xf32>
    %48 = arith.mulf %43, %47 : vector<32x8xf32>
    %49 = vector.extract_strided_slice %48 {offsets = [0, 0], sizes = [8, 8], strides = [1, 1]} : vector<32x8xf32> to vector<8x8xf32>
    %50 = arith.truncf %49 : vector<8x8xf32> to vector<8x8xbf16>
    %51 = vector.extract_strided_slice %12 {offsets = [0, 0], sizes = [8, 8], strides = [1, 1]} : vector<8x32xbf16> to vector<8x8xbf16>
    %cst_23 = arith.constant dense<0.000000e+00> : vector<8x8xf32>
    %52 = tpu.matmul %50, %51, %cst_23 {dimension_numbers = #tpu.dot_dimension_numbers<[1], [0], [0], [1], [0, 0, 1, 1], [], []>} : vector<8x8xbf16>, vector<8x8xbf16>, vector<8x8xf32> -> vector<8x8xf32>
    %c0_24 = arith.constant 0 : index
    %c0_25 = arith.constant 0 : index
    %53 = vector.load %arg11[%c0_24, %c0_25] : memref<8x32xf32, #tpu.memory_space<vmem>>, vector<8x8xf32>
    tpu.vector_store %arg11[%c0_24, %c0_25], %52 {strides = array<i32>} : memref<8x32xf32, #tpu.memory_space<vmem>>, vector<8x8xf32>,
    %54 = vector.extract_strided_slice %48 {offsets = [8, 0], sizes = [8, 8], strides = [1, 1]} : vector<32x8xf32> to vector<8x8xf32>
    %55 = arith.truncf %54 : vector<8x8xf32> to vector<8x8xbf16>
    %56 = vector.extract_strided_slice %12 {offsets = [0, 8], sizes = [8, 8], strides = [1, 1]} : vector<8x32xbf16> to vector<8x8xbf16>
    %cst_26 = arith.constant dense<0.000000e+00> : vector<8x8xf32>
    %57 = tpu.matmul %55, %56, %cst_26 {dimension_numbers = #tpu.dot_dimension_numbers<[1], [0], [0], [1], [0, 0, 1, 1], [], []>} : vector<8x8xbf16>, vector<8x8xbf16>, vector<8x8xf32> -> vector<8x8xf32>
    %c0_27 = arith.constant 0 : index
    %c8_28 = arith.constant 8 : index
    %58 = vector.load %arg11[%c0_27, %c8_28] : memref<8x32xf32, #tpu.memory_space<vmem>>, vector<8x8xf32>
    tpu.vector_store %arg11[%c0_27, %c8_28], %57 {strides = array<i32>} : memref<8x32xf32, #tpu.memory_space<vmem>>, vector<8x8xf32>,
    %59 = vector.extract_strided_slice %48 {offsets = [16, 0], sizes = [8, 8], strides = [1, 1]} : vector<32x8xf32> to vector<8x8xf32>
    %60 = arith.truncf %59 : vector<8x8xf32> to vector<8x8xbf16>
    %61 = vector.extract_strided_slice %12 {offsets = [0, 16], sizes = [8, 8], strides = [1, 1]} : vector<8x32xbf16> to vector<8x8xbf16>
    %cst_29 = arith.constant dense<0.000000e+00> : vector<8x8xf32>
    %62 = tpu.matmul %60, %61, %cst_29 {dimension_numbers = #tpu.dot_dimension_numbers<[1], [0], [0], [1], [0, 0, 1, 1], [], []>} : vector<8x8xbf16>, vector<8x8xbf16>, vector<8x8xf32> -> vector<8x8xf32>
    %c0_30 = arith.constant 0 : index
    %c16_31 = arith.constant 16 : index
    %63 = vector.load %arg11[%c0_30, %c16_31] : memref<8x32xf32, #tpu.memory_space<vmem>>, vector<8x8xf32>
    tpu.vector_store %arg11[%c0_30, %c16_31], %62 {strides = array<i32>} : memref<8x32xf32, #tpu.memory_space<vmem>>, vector<8x8xf32>,
    %64 = vector.extract_strided_slice %48 {offsets = [24, 0], sizes = [8, 8], strides = [1, 1]} : vector<32x8xf32> to vector<8x8xf32>
    %65 = arith.truncf %64 : vector<8x8xf32> to vector<8x8xbf16>
    %66 = vector.extract_strided_slice %12 {offsets = [0, 24], sizes = [8, 8], strides = [1, 1]} : vector<8x32xbf16> to vector<8x8xbf16>
    %cst_32 = arith.constant dense<0.000000e+00> : vector<8x8xf32>
    %67 = tpu.matmul %65, %66, %cst_32 {dimension_numbers = #tpu.dot_dimension_numbers<[1], [0], [0], [1], [0, 0, 1, 1], [], []>} : vector<8x8xbf16>, vector<8x8xbf16>, vector<8x8xf32> -> vector<8x8xf32>
    %c0_33 = arith.constant 0 : index
    %c24_34 = arith.constant 24 : index
    %68 = vector.load %arg11[%c0_33, %c24_34] : memref<8x32xf32, #tpu.memory_space<vmem>>, vector<8x8xf32>
    tpu.vector_store %arg11[%c0_33, %c24_34], %67 {strides = array<i32>} : memref<8x32xf32, #tpu.memory_space<vmem>>, vector<8x8xf32>,
    %c0_35 = arith.constant 0 : index
    %c0_36 = arith.constant 0 : index
    %69 = vector.load %arg11[%c0_35, %c0_36] : memref<8x32xf32, #tpu.memory_space<vmem>>, vector<8x32xf32>
    %70 = arith.truncf %69 : vector<8x32xf32> to vector<8x32xbf16>
    %c0_37 = arith.constant 0 : index
    %c0_38 = arith.constant 0 : index
    %71 = vector.load %arg4[%c0_37, %c0_38] : memref<32x32xbf16, #tpu.memory_space<vmem>>, vector<32x32xbf16>
    %cst_39 = arith.constant dense<0.000000e+00> : vector<8x32xf32>
    %72 = tpu.matmul %70, %71, %cst_39 {dimension_numbers = #tpu.dot_dimension_numbers<[1], [0], [0], [1], [0, 0, 1, 1], [], []>} : vector<8x32xbf16>, vector<32x32xbf16>, vector<8x32xf32> -> vector<8x32xf32>
    %c0_40 = arith.constant 0 : index
    %c0_41 = arith.constant 0 : index
    %73 = vector.load %arg5[%c0_40, %c0_41] : memref<1x32xf32, #tpu.memory_space<vmem>>, vector<1x32xf32>
    %74 = vector.broadcast %73 : vector<1x32xf32> to vector<8x32xf32>
    %75 = arith.addf %72, %74 : vector<8x32xf32>
    %c0_42 = arith.constant 0 : index
    %c0_43 = arith.constant 0 : index
    %c0_44 = arith.constant 0 : index
    %76 = vector.load %arg8[%c0_42, %c0_43, %c0_44] : memref<1x8x32xf32, #tpu.memory_space<vmem>>, vector<1x8x32xf32>
    %77 = vector.shape_cast %76 : vector<1x8x32xf32> to vector<8x32xf32>
    %78 = vector.shape_cast %75 : vector<8x32xf32> to vector<1x8x32xf32>
    tpu.vector_store %arg8[%c0_42, %c0_43, %c0_44], %78 {strides = array<i32>} : memref<1x8x32xf32, #tpu.memory_space<vmem>>, vector<1x8x32xf32>,
    %79 = vector.extract_strided_slice %48 {offsets = [0, 0], sizes = [8, 8], strides = [1, 1]} : vector<32x8xf32> to vector<8x8xf32>
    %80 = vector.extract_strided_slice %48 {offsets = [8, 0], sizes = [8, 8], strides = [1, 1]} : vector<32x8xf32> to vector<8x8xf32>
    %81 = arith.addf %79, %80 : vector<8x8xf32>
    %82 = vector.extract_strided_slice %48 {offsets = [16, 0], sizes = [8, 8], strides = [1, 1]} : vector<32x8xf32> to vector<8x8xf32>
    %83 = arith.addf %81, %82 : vector<8x8xf32>
    %84 = vector.extract_strided_slice %48 {offsets = [24, 0], sizes = [8, 8], strides = [1, 1]} : vector<32x8xf32> to vector<8x8xf32>
    %85 = arith.addf %83, %84 : vector<8x8xf32>
    %cst_45 = arith.constant dense<0.000000e+00> : vector<8xf32>
    %86 = vector.multi_reduction <add>, %85, %cst_45 [0] : vector<8x8xf32> to vector<8xf32>
    %87 = vector.shape_cast %86 : vector<8xf32> to vector<1x8xf32>
    %cst_46 = arith.constant 2.500000e-01 : f32
    %88 = vector.broadcast %cst_46 : f32 to vector<1x8xf32>
    %89 = arith.mulf %87, %88 : vector<1x8xf32>
    %c0_47 = arith.constant 0 : index
    %c0_48 = arith.constant 0 : index
    %c0_49 = arith.constant 0 : index
    %90 = vector.load %arg7[%c0_47, %c0_48, %c0_49] : memref<1x8x8xf32, #tpu.memory_space<vmem>>, vector<1x8x8xf32>
    %91 = vector.shape_cast %90 : vector<1x8x8xf32> to vector<8x8xf32>
    %92 = vector.broadcast %89 : vector<1x8xf32> to vector<8x8xf32>
    %93 = arith.mulf %92, %91 : vector<8x8xf32>
    %cst_50 = arith.constant 1.000000e+00 : f32
    %94 = vector.broadcast %cst_50 : f32 to vector<8x8xf32>
    %95 = arith.subf %94, %91 : vector<8x8xf32>
    %cst_51 = arith.constant -1.000000e+10 : f32
    %96 = vector.broadcast %cst_51 : f32 to vector<8x8xf32>
    %97 = arith.mulf %95, %96 : vector<8x8xf32>
    %98 = arith.addf %93, %97 : vector<8x8xf32>
    %cst_52 = arith.constant dense<0xFF800000> : vector<8xf32>
    %99 = vector.multi_reduction <maximumf>, %98, %cst_52 [1] : vector<8x8xf32> to vector<8xf32>
    %100 = vector.shape_cast %99 : vector<8xf32> to vector<8x1xf32>
    %101 = vector.broadcast %100 : vector<8x1xf32> to vector<8x8xf32>
    %102 = arith.subf %98, %101 : vector<8x8xf32>
    %103 = math.exp %102 : vector<8x8xf32>
    %cst_53 = arith.constant dense<0.000000e+00> : vector<8xf32>
    %104 = vector.multi_reduction <add>, %103, %cst_53 [1] : vector<8x8xf32> to vector<8xf32>
    %105 = vector.shape_cast %104 : vector<8xf32> to vector<8x1xf32>
    %106 = vector.broadcast %105 : vector<8x1xf32> to vector<8x8xf32>
    %107 = arith.divf %103, %106 : vector<8x8xf32>
    %108 = arith.mulf %107, %91 : vector<8x8xf32>
    %cst_54 = arith.constant dense<0.000000e+00> : vector<8xf32>
    %109 = vector.multi_reduction <add>, %108, %cst_54 [0] : vector<8x8xf32> to vector<8xf32>
    %110 = vector.shape_cast %109 : vector<8xf32> to vector<1x8xf32>
    %c0_55 = arith.constant 0 : index
    %c0_56 = arith.constant 0 : index
    %c0_57 = arith.constant 0 : index
    %111 = vector.load %arg9[%c0_55, %c0_56, %c0_57] : memref<1x1x8xf32, #tpu.memory_space<vmem>>, vector<1x1x8xf32>
    %112 = vector.shape_cast %111 : vector<1x1x8xf32> to vector<1x8xf32>
    %113 = vector.shape_cast %110 : vector<1x8xf32> to vector<1x1x8xf32>
    tpu.vector_store %arg9[%c0_55, %c0_56, %c0_57], %113 {strides = array<i32>} : memref<1x1x8xf32, #tpu.memory_space<vmem>>, vector<1x1x8xf32>,
    return
  }
  func.func @transform_0(%arg0: i32) -> (i32, i32, i32) {
    %c0_i32 = arith.constant 0 : i32
    %c0_i32_0 = arith.constant 0 : i32
    %c0_i32_1 = arith.constant 0 : i32
    return %arg0, %c0_i32, %c0_i32_0 : i32, i32, i32
  }
  func.func @transform_1(%arg0: i32) -> (i32, i32) {
    %c0_i32 = arith.constant 0 : i32
    %c0_i32_0 = arith.constant 0 : i32
    %c0_i32_1 = arith.constant 0 : i32
    return %c0_i32, %c0_i32_0 : i32, i32
  }
  func.func @transform_2(%arg0: i32) -> (i32, i32) {
    %c0_i32 = arith.constant 0 : i32
    %c0_i32_0 = arith.constant 0 : i32
    %c0_i32_1 = arith.constant 0 : i32
    return %c0_i32, %c0_i32_0 : i32, i32
  }
  func.func @transform_3(%arg0: i32) -> (i32, i32) {
    %c0_i32 = arith.constant 0 : i32
    %c0_i32_0 = arith.constant 0 : i32
    %c0_i32_1 = arith.constant 0 : i32
    return %c0_i32, %c0_i32_0 : i32, i32
  }
  func.func @transform_4(%arg0: i32) -> (i32, i32) {
    %c0_i32 = arith.constant 0 : i32
    %c0_i32_0 = arith.constant 0 : i32
    %c0_i32_1 = arith.constant 0 : i32
    return %c0_i32, %c0_i32_0 : i32, i32
  }
  func.func @transform_5(%arg0: i32) -> (i32, i32, i32) {
    %c0_i32 = arith.constant 0 : i32
    %c0_i32_0 = arith.constant 0 : i32
    %c0_i32_1 = arith.constant 0 : i32
    %c0_i32_2 = arith.constant 0 : i32
    return %c0_i32, %c0_i32_0, %c0_i32_1 : i32, i32, i32
  }
  func.func @transform_6(%arg0: i32) -> (i32, i32, i32) {
    %c0_i32 = arith.constant 0 : i32
    %c0_i32_0 = arith.constant 0 : i32
    %c0_i32_1 = arith.constant 0 : i32
    return %arg0, %c0_i32, %c0_i32_0 : i32, i32, i32
  }
  func.func @transform_7(%arg0: i32) -> (i32, i32, i32) {
    %c0_i32 = arith.constant 0 : i32
    %c0_i32_0 = arith.constant 0 : i32
    %c0_i32_1 = arith.constant 0 : i32
    return %arg0, %c0_i32, %c0_i32_0 : i32, i32, i32
  }
  func.func @transform_8(%arg0: i32) -> (i32, i32, i32) {
    %c0_i32 = arith.constant 0 : i32
    %c0_i32_0 = arith.constant 0 : i32
    %c0_i32_1 = arith.constant 0 : i32
    return %arg0, %c0_i32, %c0_i32_0 : i32, i32, i32
  }
}

</mosaic_0001>

<llo_original>
// kernel: tpu_custom_call.1
$region0: #{tpu_custom_call.1}
  #allocation0 [shape = 'u32[]', space=smem, size = 0x4, offset = 0x4, fixed_abs, tag = 'smem constant byte address 0x4 - core index']
  #allocation1 [shape = 'u32[72,128]{1,0:T(1,128)}', space=vmem, size = 0x9000, scoped, tag = 'internal scratch']
  #allocation2 [shape = 'f32[32,8]{1,0:T(8,128)}', space=vmem, size = 0x4000, scoped, tag = 'scratch operand']
  #allocation3 [shape = 'f32[8,32]{1,0:T(8,128)}', space=vmem, size = 0x1000, scoped, tag = 'scratch operand']
  %s0 = inlined_call_operand.hbm [shape: bf16[2,8,32], index: 0, kind: input, shape index: {}]
  %s1 = inlined_call_operand.hbm [shape: bf16[32,96], index: 1, kind: input, shape index: {}]
  %s2 = inlined_call_operand.vmem [shape: f32[1,96], index: 2, kind: input, shape index: {}]
  %s3 = inlined_call_operand.hbm [shape: bf16[32,32], index: 3, kind: input, shape index: {}]
  %s4 = inlined_call_operand.hbm [shape: f32[1,32], index: 4, kind: input, shape index: {}]
  %s5 = inlined_call_operand.vmem [shape: s8[1,8,8], index: 5, kind: input, shape index: {}]
  %s6 = inlined_call_operand.hbm [shape: f32[2,8,8], index: 6, kind: input, shape index: {}]
  %s7 = inlined_call_operand.hbm [shape: f32[2,8,32], index: 7, kind: output, shape index: {0}]
  %s8 = inlined_call_operand.hbm [shape: f32[2,1,8], index: 8, kind: output, shape index: {1}]
  %9 = xla_tuple %s7, %s8
  %s10 = sld [smem:[#allocation0]]
  $region89: #{tpu_custom_call.1} parent=0
    _
  %s12 = ssub.s32 1, %s10
  %s13 = scalar_select 0, %s12, %s10
  $region1: #{tpu_custom_call.1} parent=0
    #allocation4 [shape = 'u8[4096]{0}', space=vmem, size = 0x1000, scoped, tag = 'input window, operand 0']
    #allocation5 [shape = 's32[2]{0}', space=sflag, size = 0x8, scoped, tag = 'scoped memory for tpu_custom_call.1']
    #allocation6 [shape = 's32[2]{0}', space=sflag, size = 0x8, scoped, tag = 'scoped memory for tpu_custom_call.1']
    #allocation7 [shape = 'u8[8192]{0}', space=vmem, size = 0x2000, scoped, tag = 'input window, operand 1, single buffered']
    #allocation8 [shape = 's32[1]{0}', space=sflag, size = 0x4, scoped, tag = 'scoped memory for tpu_custom_call.1']
    #allocation9 [shape = 'u8[8192]{0}', space=vmem, size = 0x2000, scoped, tag = 'input window, operand 3, single buffered']
    #allocation10 [shape = 'u8[512]{0}', space=vmem, size = 0x400, scoped, tag = 'input window, operand 4, single buffered']
    #allocation11 [shape = 's32[1]{0}', space=sflag, size = 0x4, scoped, tag = 'scoped memory for tpu_custom_call.1']
    #allocation12 [shape = 'u8[8192]{0}', space=vmem, size = 0x2000, scoped, tag = 'input window, operand 6']
    #allocation13 [shape = 'u8[8192]{0}', space=vmem, size = 0x2000, scoped, tag = 'output window, operand 0']
    #allocation14 [shape = 'u8[1024]{0}', space=vmem, size = 0x400, scoped, tag = 'output window, operand 1']
    #allocation15 [shape = 's32[2]{0}', space=sflag, size = 0x8, scoped, tag = 'scoped memory for tpu_custom_call.1']
    %14 = vsyncpa [#allocation5], 0
    %s15 = scalar_lea.sflag [#allocation5], 1
    %16 = vsyncpa %s15, 0
    %17 = vsyncpa [#allocation8], 0
    %18 = vsyncpa [#allocation11], 0
    %19 = vsyncpa [#allocation6], 0
    %s20 = scalar_lea.sflag [#allocation6], 1
    %21 = vsyncpa %s20, 0
    %22 = vsyncpa [#allocation15], 0
    %s23 = scalar_lea.sflag [#allocation15], 1
    %24 = vsyncpa %s23, 0
    loop: start=0, step=1, limit=4
    $region2: #{tpu_custom_call.1} parent=1 // loop_pre_header
      _
    $region3: #{tpu_custom_call.1} parent=1 // loop_header
      %s26 = sphi 0, %s30
      %p27 = scmp.ge.s32.totalorder %s26, 4
      %s36 = sphi 0, %s38
      %s39 = sphi 0, %s36
      %s40 = sphi 0, %s39
      %s56 = sphi 0, %s40
      %s60 = sphi 0, %s60
      %s62 = sphi 0, %s60
      %s63 = sphi 0, %s62
      %s77 = sphi 0, %s63
      %s81 = sphi 0, %s81
      %s83 = sphi 0, %s81
      %s84 = sphi 0, %s83
      %s98 = sphi 0, %s84
      %s102 = sphi 0, %s102
      %s104 = sphi 0, %s102
      %s105 = sphi 0, %s104
      %s119 = sphi 0, %s105
      %s123 = sphi 0, %s123
      %s125 = sphi 0, %s123
      %s126 = sphi 0, %s125
      %s140 = sphi 0, %s126
      %s144 = sphi 0, %s144
      %s146 = sphi 0, %s144
      %s147 = sphi 0, %s146
      %s161 = sphi 0, %s147
      %s167 = sphi 0, %s169
      %s170 = sphi 0, %s167
      %s171 = sphi 0, %s170
      %s187 = sphi 0, %s171
      %s193 = sphi 0, %s195
      %s196 = sphi 0, %s193
      %s197 = sphi 0, %s196
      %s213 = sphi 0, %s197
      %s219 = sphi 0, %s221
      %s222 = sphi 0, %s219
      %s223 = sphi 0, %s222
      %s239 = sphi 0, %s223
    $region4: #{tpu_custom_call.1} parent=1 // loop_header_branch
      %29 = sbr.rel (%p27) target = $region8
    $region5: #{tpu_custom_call.1} parent=1 // loop_body
      %s31 = ssub.s32 %s26, 1
      %s32 = ssub.s32 %s26, 2
      %s33 = sadd.s32 %s26, 1
      %s34 = ssub.s32 %s26, %s33
      %p35 = scmp.eq.s32.totalorder %s34, 0
      %s37 = sadd.s32 %s36, 1
      %s38 = scalar_select %p35, %s36, %s37
      %p41 = pneg %p35
      %p42 = scmp.eq.s32.totalorder %s26, 1
      %p43 = por %p41, %p42
      %p44 = scmp.ne.s32.totalorder %s36, %s39
      %p45 = scmp.eq.s32.totalorder %s26, 0
      %p46 = por %p44, %p45
      %p47 = scmp.ne.s32.totalorder %s36, %s39
      %p48 = scmp.eq.s32.totalorder %s31, 1
      %p49 = por %p47, %p48
      %p50 = scmp.ne.s32.totalorder %s39, %s40
      %p51 = scmp.eq.s32.totalorder %s31, 0
      %p52 = por %p50, %p51
      %p53 = scmp.ne.s32.totalorder %s39, %s40
      %p54 = scmp.eq.s32.totalorder %s32, 1
      %p55 = por %p53, %p54
      %p57 = scmp.ne.s32.totalorder %s40, %s56
      %p58 = scmp.eq.s32.totalorder %s32, 0
      %p59 = por %p57, %p58
      %s61 = sadd.s32 %s60, 1
      %p64 = scmp.eq.s32.totalorder %s26, 1
      %p65 = scmp.ne.s32.totalorder %s60, %s62
      %p66 = scmp.eq.s32.totalorder %s26, 0
      %p67 = por %p65, %p66
      %p68 = scmp.ne.s32.totalorder %s60, %s62
      %p69 = scmp.eq.s32.totalorder %s31, 1
      %p70 = por %p68, %p69
      %p71 = scmp.ne.s32.totalorder %s62, %s63
      %p72 = scmp.eq.s32.totalorder %s31, 0
      %p73 = por %p71, %p72
      %p74 = scmp.ne.s32.totalorder %s62, %s63
      %p75 = scmp.eq.s32.totalorder %s32, 1
      %p76 = por %p74, %p75
      %p78 = scmp.ne.s32.totalorder %s63, %s77
      %p79 = scmp.eq.s32.totalorder %s32, 0
      %p80 = por %p78, %p79
      %s82 = sadd.s32 %s81, 1
      %p85 = scmp.eq.s32.totalorder %s26, 1
      %p86 = scmp.ne.s32.totalorder %s81, %s83
      %p87 = scmp.eq.s32.totalorder %s26, 0
      %p88 = por %p86, %p87
      %p89 = scmp.ne.s32.totalorder %s81, %s83
      %p90 = scmp.eq.s32.totalorder %s31, 1
      %p91 = por %p89, %p90
      %p92 = scmp.ne.s32.totalorder %s83, %s84
      %p93 = scmp.eq.s32.totalorder %s31, 0
      %p94 = por %p92, %p93
      %p95 = scmp.ne.s32.totalorder %s83, %s84
      %p96 = scmp.eq.s32.totalorder %s32, 1
      %p97 = por %p95, %p96
      %p99 = scmp.ne.s32.totalorder %s84, %s98
      %p100 = scmp.eq.s32.totalorder %s32, 0
      %p101 = por %p99, %p100
      %s103 = sadd.s32 %s102, 1
      %p106 = scmp.eq.s32.totalorder %s26, 1
      %p107 = scmp.ne.s32.totalorder %s102, %s104
      %p108 = scmp.eq.s32.totalorder %s26, 0
      %p109 = por %p107, %p108
      %p110 = scmp.ne.s32.totalorder %s102, %s104
      %p111 = scmp.eq.s32.totalorder %s31, 1
      %p112 = por %p110, %p111
      %p113 = scmp.ne.s32.totalorder %s104, %s105
      %p114 = scmp.eq.s32.totalorder %s31, 0
      %p115 = por %p113, %p114
      %p116 = scmp.ne.s32.totalorder %s104, %s105
      %p117 = scmp.eq.s32.totalorder %s32, 1
      %p118 = por %p116, %p117
      %p120 = scmp.ne.s32.totalorder %s105, %s119
      %p121 = scmp.eq.s32.totalorder %s32, 0
      %p122 = por %p120, %p121
      %s124 = sadd.s32 %s123, 1
      %p127 = scmp.eq.s32.totalorder %s26, 1
      %p128 = scmp.ne.s32.totalorder %s123, %s125
      %p129 = scmp.eq.s32.totalorder %s26, 0
      %p130 = por %p128, %p129
      %p131 = scmp.ne.s32.totalorder %s123, %s125
      %p132 = scmp.eq.s32.totalorder %s31, 1
      %p133 = por %p131, %p132
      %p134 = scmp.ne.s32.totalorder %s125, %s126
      %p135 = scmp.eq.s32.totalorder %s31, 0
      %p136 = por %p134, %p135
      %p137 = scmp.ne.s32.totalorder %s125, %s126
      %p138 = scmp.eq.s32.totalorder %s32, 1
      %p139 = por %p137, %p138
      %p141 = scmp.ne.s32.totalorder %s126, %s140
      %p142 = scmp.eq.s32.totalorder %s32, 0
      %p143 = por %p141, %p142
      %s145 = sadd.s32 %s144, 1
      %p148 = scmp.eq.s32.totalorder %s26, 1
      %p149 = scmp.ne.s32.totalorder %s144, %s146
      %p150 = scmp.eq.s32.totalorder %s26, 0
      %p151 = por %p149, %p150
      %p152 = scmp.ne.s32.totalorder %s144, %s146
      %p153 = scmp.eq.s32.totalorder %s31, 1
      %p154 = por %p152, %p153
      %p155 = scmp.ne.s32.totalorder %s146, %s147
      %p156 = scmp.eq.s32.totalorder %s31, 0
      %p157 = por %p155, %p156
      %p158 = scmp.ne.s32.totalorder %s146, %s147
      %p159 = scmp.eq.s32.totalorder %s32, 1
      %p160 = por %p158, %p159
      %p162 = scmp.ne.s32.totalorder %s147, %s161
      %p163 = scmp.eq.s32.totalorder %s32, 0
      %p164 = por %p162, %p163
      %s165 = ssub.s32 %s26, %s33
      %p166 = scmp.eq.s32.totalorder %s165, 0
      %s168 = sadd.s32 %s167, 1
      %s169 = scalar_select %p166, %s167, %s168
      %p172 = pneg %p166
      %p173 = scmp.eq.s32.totalorder %s26, 1
      %p174 = por %p172, %p173
      %p175 = scmp.ne.s32.totalorder %s167, %s170
      %p176 = scmp.eq.s32.totalorder %s26, 0
      %p177 = por %p175, %p176
      %p178 = scmp.ne.s32.totalorder %s167, %s170
      %p179 = scmp.eq.s32.totalorder %s31, 1
      %p180 = por %p178, %p179
      %p181 = scmp.ne.s32.totalorder %s170, %s171
      %p182 = scmp.eq.s32.totalorder %s31, 0
      %p183 = por %p181, %p182
      %p184 = scmp.ne.s32.totalorder %s170, %s171
      %p185 = scmp.eq.s32.totalorder %s32, 1
      %p186 = por %p184, %p185
      %p188 = scmp.ne.s32.totalorder %s171, %s187
      %p189 = scmp.eq.s32.totalorder %s32, 0
      %p190 = por %p188, %p189
      %s191 = ssub.s32 %s26, %s33
      %p192 = scmp.eq.s32.totalorder %s191, 0
      %s194 = sadd.s32 %s193, 1
      %s195 = scalar_select %p192, %s193, %s194
      %p198 = pneg %p192
      %p199 = scmp.eq.s32.totalorder %s26, 1
      %p200 = por %p198, %p199
      %p201 = scmp.ne.s32.totalorder %s193, %s196
      %p202 = scmp.eq.s32.totalorder %s26, 0
      %p203 = por %p201, %p202
      %p204 = scmp.ne.s32.totalorder %s193, %s196
      %p205 = scmp.eq.s32.totalorder %s31, 1
      %p206 = por %p204, %p205
      %p207 = scmp.ne.s32.totalorder %s196, %s197
      %p208 = scmp.eq.s32.totalorder %s31, 0
      %p209 = por %p207, %p208
      %p210 = scmp.ne.s32.totalorder %s196, %s197
      %p211 = scmp.eq.s32.totalorder %s32, 1
      %p212 = por %p210, %p211
      %p214 = scmp.ne.s32.totalorder %s197, %s213
      %p215 = scmp.eq.s32.totalorder %s32, 0
      %p216 = por %p214, %p215
      %s217 = ssub.s32 %s26, %s33
      %p218 = scmp.eq.s32.totalorder %s217, 0
      %s220 = sadd.s32 %s219, 1
      %s221 = scalar_select %p218, %s219, %s220
      %p224 = pneg %p218
      %p225 = scmp.eq.s32.totalorder %s26, 1
      %p226 = por %p224, %p225
      %p227 = scmp.ne.s32.totalorder %s219, %s222
      %p228 = scmp.eq.s32.totalorder %s26, 0
      %p229 = por %p227, %p228
      %p230 = scmp.ne.s32.totalorder %s219, %s222
      %p231 = scmp.eq.s32.totalorder %s31, 1
      %p232 = por %p230, %p231
      %p233 = scmp.ne.s32.totalorder %s222, %s223
      %p234 = scmp.eq.s32.totalorder %s31, 0
      %p235 = por %p233, %p234
      %p236 = scmp.ne.s32.totalorder %s222, %s223
      %p237 = scmp.eq.s32.totalorder %s32, 1
      %p238 = por %p236, %p237
      %p240 = scmp.ne.s32.totalorder %s223, %s239
      %p241 = scmp.eq.s32.totalorder %s32, 0
      %p242 = por %p240, %p241
      %p243 = scmp.le.s32.totalorder 1, %s26
      %p244 = scmp.lt.s32.totalorder %s26, 3
      %p245 = pnand %p243, %p244
      %p246 = pneg %p245
      // Predicated region
      $region9: #{tpu_custom_call.1} parent=5 // pred_check
        _
      $region10: #{tpu_custom_call.1} parent=5 // pred_check_branch
        %248 = sbr.rel (%p245) target = $region12
      $region11: #{tpu_custom_call.1} parent=5 // pred_region
        %s249 = ssub.s32 %s26, 1
        // Predicated region
        $region13: #{tpu_custom_call.1} parent=11 // pred_check
          %p250 = pneg %p73
        $region14: #{tpu_custom_call.1} parent=11 // pred_check_branch
          %252 = sbr.rel (%p250) target = $region16
        $region15: #{tpu_custom_call.1} parent=11 // pred_region
          %254 = vsyncadd [#allocation8], 0
          %s255 = sshll.u32 %s1, 4
          %s256 = int_to_ptr.hbm [resolvable:$true] %s255
          %s257 = sshll.u32 [#allocation7], 4
          %s258 = int_to_ptr.vmem [resolvable:$true] %s257
          %263 = dma.hbm_to_vmem [thread:$0]  %s256, 256, %s258, [#allocation8], 64, 64, 4
        $region16: #{tpu_custom_call.1} parent=11 // pred_fallthru
          _
        // Predicated region
        $region17: #{tpu_custom_call.1} parent=11 // pred_check
          %p264 = pneg %p94
        $region18: #{tpu_custom_call.1} parent=11 // pred_check_branch
          %266 = sbr.rel (%p264) target = $region20
        $region19: #{tpu_custom_call.1} parent=11 // pred_region
          _
        $region20: #{tpu_custom_call.1} parent=11 // pred_fallthru
          _
        // Predicated region
        $region21: #{tpu_custom_call.1} parent=11 // pred_check
          %p267 = pneg %p115
        $region22: #{tpu_custom_call.1} parent=11 // pred_check_branch
          %269 = sbr.rel (%p267) target = $region24
        $region23: #{tpu_custom_call.1} parent=11 // pred_region
          %271 = vsyncadd [#allocation8], 0
          %s272 = sshll.u32 %s3, 4
          %s273 = int_to_ptr.hbm [resolvable:$true] %s272
          %s274 = sshll.u32 [#allocation9], 4
          %s275 = int_to_ptr.vmem [resolvable:$true] %s274
          %280 = dma.hbm_to_vmem [thread:$0]  %s273, 256, %s275, [#allocation8], 64, 64, 4
        $region24: #{tpu_custom_call.1} parent=11 // pred_fallthru
          _
        // Predicated region
        $region25: #{tpu_custom_call.1} parent=11 // pred_check
          %p281 = pneg %p136
        $region26: #{tpu_custom_call.1} parent=11 // pred_check_branch
          %283 = sbr.rel (%p281) target = $region28
        $region27: #{tpu_custom_call.1} parent=11 // pred_region
          %285 = vsyncadd [#allocation11], 0
          %s287 = sshll.u32 %s4, 4
          %s288 = int_to_ptr.hbm [resolvable:$true] %s287
          %s289 = sshll.u32 [#allocation10], 4
          %s290 = int_to_ptr.vmem [resolvable:$true] %s289
          %292 = dma.hbm_to_vmem [thread:$0]  %s288, 16, %s290, [#allocation11]
        $region28: #{tpu_custom_call.1} parent=11 // pred_fallthru
          _
        // Predicated region
        $region29: #{tpu_custom_call.1} parent=11 // pred_check
          %p293 = pneg %p157
        $region30: #{tpu_custom_call.1} parent=11 // pred_check_branch
          %295 = sbr.rel (%p293) target = $region32
        $region31: #{tpu_custom_call.1} parent=11 // pred_region
          _
        $region32: #{tpu_custom_call.1} parent=11 // pred_fallthru
          _
      $region12: #{tpu_custom_call.1} parent=5 // pred_fallthru
        _
      %p296 = scmp.lt.s32.totalorder %s26, 2
      // Predicated region
      $region33: #{tpu_custom_call.1} parent=5 // pred_check
        %p297 = pneg %p296
      $region34: #{tpu_custom_call.1} parent=5 // pred_check_branch
        %299 = sbr.rel (%p297) target = $region36
      $region35: #{tpu_custom_call.1} parent=5 // pred_region
        // Predicated region
        $region37: #{tpu_custom_call.1} parent=35 // pred_check
          %p300 = pneg %p46
        $region38: #{tpu_custom_call.1} parent=35 // pred_check_branch
          %302 = sbr.rel (%p300) target = $region40
        $region39: #{tpu_custom_call.1} parent=35 // pred_region
          %s303 = sand.u32 %s26, 1
          %s304 = scalar_lea.sflag [#allocation5], %s303
          %s305 = sand.u32 %s36, 1
          %s306 = smul.addr %s305, 4
          %s307 = scalar_lea.vmem [#allocation4], %s306
          %309 = vsyncadd %s304, 0
          %s310 = smul.addr %s26, 4
          %s311 = scalar_lea.hbm %s0, %s310
          %s313 = sshll.u32 %s311, 4
          %s314 = int_to_ptr.hbm [resolvable:$true] %s313
          %s315 = sshll.u32 %s307, 4
          %s316 = int_to_ptr.vmem [resolvable:$true] %s315
          %318 = dma.hbm_to_vmem [thread:$0]  %s314, 64, %s316, %s304
        $region40: #{tpu_custom_call.1} parent=35 // pred_fallthru
          _
        // Predicated region
        $region41: #{tpu_custom_call.1} parent=35 // pred_check
          %p319 = pneg %p177
        $region42: #{tpu_custom_call.1} parent=35 // pred_check_branch
          %321 = sbr.rel (%p319) target = $region44
        $region43: #{tpu_custom_call.1} parent=35 // pred_region
          %s322 = sand.u32 %s26, 1
          %s323 = scalar_lea.sflag [#allocation5], %s322
          %s324 = sand.u32 %s167, 1
          %s325 = smul.addr %s324, 8
          %s326 = scalar_lea.vmem [#allocation12], %s325
          %328 = vsyncadd %s323, 0
          %s329 = smul.addr %s26, 8
          %s330 = scalar_lea.hbm %s6, %s329
          %s332 = sshll.u32 %s330, 4
          %s333 = int_to_ptr.hbm [resolvable:$true] %s332
          %s334 = sshll.u32 %s326, 4
          %s335 = int_to_ptr.vmem [resolvable:$true] %s334
          %337 = dma.hbm_to_vmem [thread:$0]  %s333, 128, %s335, %s323
        $region44: #{tpu_custom_call.1} parent=35 // pred_fallthru
          _
      $region36: #{tpu_custom_call.1} parent=5 // pred_fallthru
        _
      %p338 = scmp.le.s32.totalorder 1, %s26
      %p339 = scmp.lt.s32.totalorder %s26, 3
      %p340 = pnand %p338, %p339
      %p341 = pneg %p340
      // Predicated region
      $region45: #{tpu_custom_call.1} parent=5 // pred_check
        _
      $region46: #{tpu_custom_call.1} parent=5 // pred_check_branch
        %343 = sbr.rel (%p340) target = $region48
      $region47: #{tpu_custom_call.1} parent=5 // pred_region
        %s344 = ssub.s32 %s26, 1
        %s345 = sand.u32 %s31, 1
        %s346 = scalar_lea.sflag [#allocation5], %s345
        %s347 = sand.u32 %s39, 1
        %s348 = smul.addr %s347, 4
        %s349 = scalar_lea.vmem [#allocation4], %s348
        // Predicated region
        $region49: #{tpu_custom_call.1} parent=47 // pred_check
          %p350 = pneg %p52
        $region50: #{tpu_custom_call.1} parent=47 // pred_check_branch
          %352 = sbr.rel (%p350) target = $region52
        $region51: #{tpu_custom_call.1} parent=47 // pred_region
          %354 = dma.done %s346, 64
        $region52: #{tpu_custom_call.1} parent=47 // pred_fallthru
          _
        // Predicated region
        $region53: #{tpu_custom_call.1} parent=47 // pred_check
          %p355 = pneg %p73
        $region54: #{tpu_custom_call.1} parent=47 // pred_check_branch
          %357 = sbr.rel (%p355) target = $region56
        $region55: #{tpu_custom_call.1} parent=47 // pred_region
          %359 = dma.done [#allocation8], 256
        $region56: #{tpu_custom_call.1} parent=47 // pred_fallthru
          _
        // Predicated region
        $region57: #{tpu_custom_call.1} parent=47 // pred_check
          %p360 = pneg %p115
        $region58: #{tpu_custom_call.1} parent=47 // pred_check_branch
          %362 = sbr.rel (%p360) target = $region60
        $region59: #{tpu_custom_call.1} parent=47 // pred_region
          %364 = dma.done [#allocation8], 256
        $region60: #{tpu_custom_call.1} parent=47 // pred_fallthru
          _
        // Predicated region
        $region61: #{tpu_custom_call.1} parent=47 // pred_check
          %p365 = pneg %p136
        $region62: #{tpu_custom_call.1} parent=47 // pred_check_branch
          %367 = sbr.rel (%p365) target = $region64
        $region63: #{tpu_custom_call.1} parent=47 // pred_region
          %369 = dma.done [#allocation11], 16
        $region64: #{tpu_custom_call.1} parent=47 // pred_fallthru
          _
        %s370 = sand.u32 %s31, 1
        %s371 = scalar_lea.sflag [#allocation5], %s370
        %s372 = sand.u32 %s170, 1
        %s373 = smul.addr %s372, 8
        %s374 = scalar_lea.vmem [#allocation12], %s373
        // Predicated region
        $region65: #{tpu_custom_call.1} parent=47 // pred_check
          %p375 = pneg %p183
        $region66: #{tpu_custom_call.1} parent=47 // pred_check_branch
          %377 = sbr.rel (%p375) target = $region68
        $region67: #{tpu_custom_call.1} parent=47 // pred_region
          %379 = dma.done %s371, 128
        $region68: #{tpu_custom_call.1} parent=47 // pred_fallthru
          _
        %s380 = sand.u32 %s31, 1
        %s381 = scalar_lea.sflag [#allocation5], %s380
        %s382 = sand.u32 %s39, 1
        %s383 = smul.addr %s382, 4
        %s384 = scalar_lea.vmem [#allocation4], %s383
        %p385 = pneg %p52
        %p386 = pneg %p49
        %p387 = pneg %p73
        %p388 = pneg %p70
        %p389 = pneg %p94
        %p390 = pneg %p91
        %p391 = pneg %p115
        %p392 = pneg %p112
        %p393 = pneg %p136
        %p394 = pneg %p133
        %p395 = pneg %p157
        %p396 = pneg %p154
        %s397 = sand.u32 %s31, 1
        %s398 = scalar_lea.sflag [#allocation5], %s397
        %s399 = sand.u32 %s170, 1
        %s400 = smul.addr %s399, 8
        %s401 = scalar_lea.vmem [#allocation12], %s400
        %p402 = pneg %p183
        %p403 = pneg %p180
        %p404 = pneg %p209
        %p405 = pneg %p206
        %s406 = sand.u32 %s196, 1
        %s407 = scalar_lea.sflag [#allocation6], %s406
        %s408 = sand.u32 %s196, 1
        %s409 = smul.addr %s408, 8
        %s410 = scalar_lea.vmem [#allocation13], %s409
        %p411 = pneg %p235
        %p412 = pneg %p232
        %s413 = sand.u32 %s222, 1
        %s414 = scalar_lea.sflag [#allocation15], %s413
        %s415 = sand.u32 %s222, 1
        %s416 = scalar_lea.vmem [#allocation14], %s415
        %v418 = vld [vmem:[%s349] sm:$0xf]
        %v419 = vld [vmem:[#allocation7] sm:$0xf]
        %v420 = vld [vmem:[#allocation7 + $0x4] sm:$0xf]
        %v421 = vld [vmem:[#allocation7 + $0x8] sm:$0xf]
        %v422 = vld [vmem:[#allocation7 + $0xc] sm:$0xf]
        %v423 = vld [vmem:[%s2] sm:$0x1]
        %v425 = vperm.slane %v423, 0
        %v431 = vunpack.c.l.b16 %v419
        %v432 = vunpack.c.l.b16 %v420
        %v433 = vunpack.c.l.b16 %v421
        %v434 = vunpack.c.l.b16 %v422
        %v435 = vpack.c.b16 %v432, %v431
        %v436 = vpack.c.b16 %v434, %v433
        %vm439 = vcmask 261120
        %v441 = vsel %vm439, %v418, 0
        %443 = vmatpush.bf16.msra.mxu0 0
        %444 = vmatpush.bf16.msra.mxu0 0
        %445 = vmatpush.bf16.msra.mxu0 0
        %446 = vmatpush.bf16.msra.mxu0 0
        %447 = vmatpush.bf16.msra.mxu0 0
        %448 = vmatpush.bf16.msra.mxu0 0
        %449 = vmatpush.bf16.msra.mxu0 %v436
        %450 = vmatpush.bf16.msra.mxu0 %v435
        %451 = vmatmul.bf16.gmra.mxu0 %v441
        %v452 = vpop.f32.mrf.mxu0
        %v453 = vadd.f32 %v425, %v452
        %v454 = vpop.f32.mrf.mxu0
        %455 = vdwg.mxu0
        %v456 = vpack.c.bf16 %v453, %v453
        %v457 = vld [vmem:[%s5] sm:$0x3]
        %v458 = vunpack.c.0.s8 %v457
        %v459 = vcvt.s32.f32 %v458
        %v460 = vmul.f32 %v459, -1e+09
        %v462 = vunpack.c.l.b16 %v456
        %v463 = vpack.c.b16 %v462, %v462
        %464 = vrot.lane.b32.xlu0 %v463, 96
        %v465 = vpop.permute.xlu0 %464
        %vm466 = vcmask 64512
        %v468 = vsel %vm466, %v456, 0
        %v471 = vsel %vm466, %v465, 0
        %473 = vmatpush.bf16.xpose.msra.mxu0 0
        %474 = vmatpush.bf16.xpose.msra.mxu0 0
        %475 = vmatpush.bf16.xpose.msra.mxu0 0
        %476 = vmatpush.bf16.xpose.msra.mxu0 0
        %477 = vmatpush.bf16.xpose.msra.mxu0 0
        %478 = vmatpush.bf16.xpose.msra.mxu0 0
        %479 = vmatpush.bf16.xpose.msra.mxu0 0
        %480 = vmatpush.bf16.xpose.msra.mxu0 %v471
        %481 = vmatmul.bf16.gmra.mxu0 %v468
        %v482 = vpop.f32.mrf.mxu0
        %v483 = vadd.f32 %v460, %v482
        %v484 = vpop.f32.mrf.mxu0
        %485 = vdwg.mxu0
        %486 = vst.msk [vmem:[#allocation2] sm:$0xff] %vm466, %v483
        %487 = vrot.lane.b32.xlu0 %v463, 120
        %v488 = vpop.permute.xlu0 %487
        %489 = vrot.lane.b32.xlu0 %v463, 88
        %v490 = vpop.permute.xlu0 %489
        %v492 = vsel %vm466, %v488, 0
        %v495 = vsel %vm466, %v490, 0
        %497 = vmatpush.bf16.xpose.msra.mxu0 0
        %498 = vmatpush.bf16.xpose.msra.mxu0 0
        %499 = vmatpush.bf16.xpose.msra.mxu0 0
        %500 = vmatpush.bf16.xpose.msra.mxu0 0
        %501 = vmatpush.bf16.xpose.msra.mxu0 0
        %502 = vmatpush.bf16.xpose.msra.mxu0 0
        %503 = vmatpush.bf16.xpose.msra.mxu0 0
        %504 = vmatpush.bf16.xpose.msra.mxu0 %v495
        %505 = vmatmul.bf16.gmra.mxu0 %v492
        %v506 = vpop.f32.mrf.mxu0
        %v507 = vadd.f32 %v460, %v506
        %v508 = vpop.f32.mrf.mxu0
        %509 = vdwg.mxu0
        %510 = vst.msk [vmem:[#allocation2 + $0x8] sm:$0xff] %vm466, %v507
        %511 = vrot.lane.b32.xlu0 %v463, 112
        %v512 = vpop.permute.xlu0 %511
        %513 = vrot.lane.b32.xlu0 %v463, 80
        %v514 = vpop.permute.xlu0 %513
        %v516 = vsel %vm466, %v512, 0
        %v519 = vsel %vm466, %v514, 0
        %521 = vmatpush.bf16.xpose.msra.mxu0 0
        %522 = vmatpush.bf16.xpose.msra.mxu0 0
        %523 = vmatpush.bf16.xpose.msra.mxu0 0
        %524 = vmatpush.bf16.xpose.msra.mxu0 0
        %525 = vmatpush.bf16.xpose.msra.mxu0 0
        %526 = vmatpush.bf16.xpose.msra.mxu0 0
        %527 = vmatpush.bf16.xpose.msra.mxu0 0
        %528 = vmatpush.bf16.xpose.msra.mxu0 %v519
        %529 = vmatmul.bf16.gmra.mxu0 %v516
        %v530 = vpop.f32.mrf.mxu0
        %v531 = vadd.f32 %v460, %v530
        %v532 = vpop.f32.mrf.mxu0
        %533 = vdwg.mxu0
        %534 = vst.msk [vmem:[#allocation2 + $0x10] sm:$0xff] %vm466, %v531
        %535 = vrot.lane.b32.xlu0 %v463, 104
        %v536 = vpop.permute.xlu0 %535
        %537 = vrot.lane.b32.xlu0 %v463, 72
        %v538 = vpop.permute.xlu0 %537
        %v540 = vsel %vm466, %v536, 0
        %v543 = vsel %vm466, %v538, 0
        %545 = vmatpush.bf16.xpose.msra.mxu0 0
        %546 = vmatpush.bf16.xpose.msra.mxu0 0
        %547 = vmatpush.bf16.xpose.msra.mxu0 0
        %548 = vmatpush.bf16.xpose.msra.mxu0 0
        %549 = vmatpush.bf16.xpose.msra.mxu0 0
        %550 = vmatpush.bf16.xpose.msra.mxu0 0
        %551 = vmatpush.bf16.xpose.msra.mxu0 0
        %552 = vmatpush.bf16.xpose.msra.mxu0 %v543
        %553 = vmatmul.bf16.gmra.mxu0 %v540
        %v554 = vpop.f32.mrf.mxu0
        %v555 = vadd.f32 %v460, %v554
        %v556 = vpop.f32.mrf.mxu0
        %557 = vdwg.mxu0
        %558 = vst.msk [vmem:[#allocation2 + $0x18] sm:$0xff] %vm466, %v555
        %v559 = vld [vmem:[#allocation2] sm:$0xff]
        %v560 = vld [vmem:[#allocation2 + $0x8] sm:$0xff]
        %v561 = vld [vmem:[#allocation2 + $0x10] sm:$0xff]
        %v562 = vld [vmem:[#allocation2 + $0x18] sm:$0xff]
        %v563 = vsel %vm466, %v559, -inf
        %564 = vmax.xlane.f32.xlu0 %v563
        %v565 = vpop.xlane.xlu0 %564
        %v566 = vsel %vm466, %v560, -inf
        %567 = vmax.xlane.f32.xlu0 %v566
        %v568 = vpop.xlane.xlu0 %567
        %v569 = vsel %vm466, %v561, -inf
        %570 = vmax.xlane.f32.xlu0 %v569
        %v571 = vpop.xlane.xlu0 %570
        %v572 = vsel %vm466, %v562, -inf
        %573 = vmax.xlane.f32.xlu0 %v572
        %v574 = vpop.xlane.xlu0 %573
        %v575 = vsub.f32 %v559, %v565
        %v576 = vsub.f32 %v560, %v568
        %v577 = vsub.f32 %v561, %v571
        %v578 = vsub.f32 %v562, %v574
        %v579 = vmul.f32 %v575, 1.442695
        %v580 = vpow.pop %v579
        %v581 = vmul.f32 %v576, 1.442695
        %v582 = vpow.pop %v581
        %v583 = vmul.f32 %v577, 1.442695
        %v584 = vpow.pop %v583
        %v585 = vmul.f32 %v578, 1.442695
        %v586 = vpow.pop %v585
        %v587 = vsel %vm466, %v580, 0.0
        %588 = vadd.xlane.f32.xlu0 %v587
        %v589 = vpop.xlane.xlu0 %588
        %v590 = vsel %vm466, %v582, 0.0
        %591 = vadd.xlane.f32.xlu0 %v590
        %v592 = vpop.xlane.xlu0 %591
        %v593 = vsel %vm466, %v584, 0.0
        %594 = vadd.xlane.f32.xlu0 %v593
        %v595 = vpop.xlane.xlu0 %594
        %v596 = vsel %vm466, %v586, 0.0
        %597 = vadd.xlane.f32.xlu0 %v596
        %v598 = vpop.xlane.xlu0 %597
        %v599 = vrcp.pop %v589
        %v600 = vrcp.pop %v592
        %v601 = vrcp.pop %v595
        %v602 = vrcp.pop %v598
        %v603 = vmul.f32 %v580, %v599
        %v604 = vmul.f32 %v582, %v600
        %v605 = vmul.f32 %v584, %v601
        %v606 = vmul.f32 %v586, %v602
        %v607 = vpack.c.bf16 %v603, %v603
        %608 = vrot.lane.b32.xlu0 %v463, 64
        %v609 = vpop.permute.xlu0 %608
        %v611 = vsel %vm466, %v607, 0
        %vm613 = vcmask 1043456
        %v615 = vsel %vm613, %v609, 0
        %617 = vmatpush.bf16.msra.mxu0 0
        %618 = vmatpush.bf16.msra.mxu0 0
        %619 = vmatpush.bf16.msra.mxu0 0
        %620 = vmatpush.bf16.msra.mxu0 0
        %621 = vmatpush.bf16.msra.mxu0 0
        %622 = vmatpush.bf16.msra.mxu0 0
        %623 = vmatpush.bf16.msra.mxu0 0
        %624 = vmatpush.bf16.msra.mxu0 %v615
        %625 = vmatmul.bf16.gmra.mxu0 %v611
        %v626 = vpop.f32.mrf.mxu0
        %v627 = vadd.f32 0.0, %v626
        %v628 = vpop.f32.mrf.mxu0
        %629 = vdwg.mxu0
        %630 = vst.msk [vmem:[#allocation3] sm:$0xff] %vm466, %v627
        %v631 = vpack.c.bf16 %v604, %v604
        %632 = vrot.lane.b32.xlu0 %v463, 56
        %v633 = vpop.permute.xlu0 %632
        %v635 = vsel %vm466, %v631, 0
        %v638 = vsel %vm613, %v633, 0
        %640 = vmatpush.bf16.msra.mxu0 0
        %641 = vmatpush.bf16.msra.mxu0 0
        %642 = vmatpush.bf16.msra.mxu0 0
        %643 = vmatpush.bf16.msra.mxu0 0
        %644 = vmatpush.bf16.msra.mxu0 0
        %645 = vmatpush.bf16.msra.mxu0 0
        %646 = vmatpush.bf16.msra.mxu0 0
        %647 = vmatpush.bf16.msra.mxu0 %v638
        %648 = vmatmul.bf16.gmra.mxu0 %v635
        %v649 = vpop.f32.mrf.mxu0
        %v650 = vadd.f32 0.0, %v649
        %v651 = vpop.f32.mrf.mxu0
        %652 = vdwg.mxu0
        %654 = vrot.lane.b32.xlu0 %v650, 8
        %v655 = vpop.permute.xlu0 %654
        %vm657 = vcmask 130112
        %658 = vst.msk [vmem:[#allocation3] sm:$0xff] %vm657, %v655
        %v659 = vpack.c.bf16 %v605, %v605
        %660 = vrot.lane.b32.xlu0 %v463, 48
        %v661 = vpop.permute.xlu0 %660
        %v663 = vsel %vm466, %v659, 0
        %v666 = vsel %vm613, %v661, 0
        %668 = vmatpush.bf16.msra.mxu0 0
        %669 = vmatpush.bf16.msra.mxu0 0
        %670 = vmatpush.bf16.msra.mxu0 0
        %671 = vmatpush.bf16.msra.mxu0 0
        %672 = vmatpush.bf16.msra.mxu0 0
        %673 = vmatpush.bf16.msra.mxu0 0
        %674 = vmatpush.bf16.msra.mxu0 0
        %675 = vmatpush.bf16.msra.mxu0 %v666
        %676 = vmatmul.bf16.gmra.mxu0 %v663
        %v677 = vpop.f32.mrf.mxu0
        %v678 = vadd.f32 0.0, %v677
        %v679 = vpop.f32.mrf.mxu0
        %680 = vdwg.mxu0
        %682 = vrot.lane.b32.xlu0 %v678, 16
        %v683 = vpop.permute.xlu0 %682
        %vm685 = vcmask 195712
        %686 = vst.msk [vmem:[#allocation3] sm:$0xff] %vm685, %v683
        %v687 = vpack.c.bf16 %v606, %v606
        %688 = vrot.lane.b32.xlu0 %v463, 40
        %v689 = vpop.permute.xlu0 %688
        %v691 = vsel %vm466, %v687, 0
        %v694 = vsel %vm613, %v689, 0
        %696 = vmatpush.bf16.msra.mxu0 0
        %697 = vmatpush.bf16.msra.mxu0 0
        %698 = vmatpush.bf16.msra.mxu0 0
        %699 = vmatpush.bf16.msra.mxu0 0
        %700 = vmatpush.bf16.msra.mxu0 0
        %701 = vmatpush.bf16.msra.mxu0 0
        %702 = vmatpush.bf16.msra.mxu0 0
        %703 = vmatpush.bf16.msra.mxu0 %v694
        %704 = vmatmul.bf16.gmra.mxu0 %v691
        %v705 = vpop.f32.mrf.mxu0
        %v706 = vadd.f32 0.0, %v705
        %v707 = vpop.f32.mrf.mxu0
        %708 = vdwg.mxu0
        %710 = vrot.lane.b32.xlu0 %v706, 24
        %v711 = vpop.permute.xlu0 %710
        %vm713 = vcmask 261312
        %714 = vst.msk [vmem:[#allocation3] sm:$0xff] %vm713, %v711
        %v715 = vld [vmem:[#allocation3] sm:$0xff]
        %v716 = vpack.c.bf16 %v715, %v715
        %v717 = vld [vmem:[#allocation9] sm:$0xf]
        %v718 = vld [vmem:[#allocation9 + $0x4] sm:$0xf]
        %v719 = vld [vmem:[#allocation9 + $0x8] sm:$0xf]
        %v720 = vld [vmem:[#allocation9 + $0xc] sm:$0xf]
        %v721 = vld [vmem:[#allocation10] sm:$0x1]
        %v723 = vperm.slane %v721, 0
        %v729 = vunpack.c.l.b16 %v717
        %v730 = vunpack.c.l.b16 %v718
        %v731 = vunpack.c.l.b16 %v719
        %v732 = vunpack.c.l.b16 %v720
        %v733 = vpack.c.b16 %v730, %v729
        %v734 = vpack.c.b16 %v732, %v731
        %v738 = vsel %vm439, %v716, 0
        %740 = vmatpush.bf16.msra.mxu0 0
        %741 = vmatpush.bf16.msra.mxu0 0
        %742 = vmatpush.bf16.msra.mxu0 0
        %743 = vmatpush.bf16.msra.mxu0 0
        %744 = vmatpush.bf16.msra.mxu0 0
        %745 = vmatpush.bf16.msra.mxu0 0
        %746 = vmatpush.bf16.msra.mxu0 %v734
        %747 = vmatpush.bf16.msra.mxu0 %v733
        %748 = vmatmul.bf16.gmra.mxu0 %v738
        %v749 = vpop.f32.mrf.mxu0
        %v750 = vadd.f32 %v723, %v749
        %v751 = vpop.f32.mrf.mxu0
        %752 = vdwg.mxu0
        %753 = vst.msk [vmem:[%s410] sm:$0xff] %vm439, %v750
        %v754 = vadd.f32 %v603, %v604
        %v755 = vadd.f32 %v754, %v605
        %v756 = vadd.f32 %v755, %v606
        %v757 = vsel %vm466, %v756, 0.0
        %v758 = vrot.slane %v757, 4
        %v759 = vadd.f32 %v757, %v758
        %v760 = vrot.slane %v759, 2
        %v761 = vadd.f32 %v759, %v760
        %v762 = vrot.slane %v761, 1
        %v763 = vadd.f32 %v761, %v762
        %v764 = vmul.f32 %v763, 0.25
        %v765 = vld [vmem:[%s374] sm:$0xff]
        %v766 = vmul.f32 %v764, %v765
        %v767 = vsub.f32 1.0, %v765
        %v768 = vmul.f32 %v767, -1e+10
        %v769 = vadd.f32 %v766, %v768
        %v770 = vsel %vm466, %v769, -inf
        %771 = vmax.xlane.f32.xlu0 %v770
        %v772 = vpop.xlane.xlu0 %771
        %v773 = vsub.f32 %v769, %v772
        %v774 = vmul.f32 %v773, 1.442695
        %v775 = vpow.pop %v774
        %v776 = vsel %vm466, %v775, 0.0
        %777 = vadd.xlane.f32.xlu0 %v776
        %v778 = vpop.xlane.xlu0 %777
        %v779 = vrcp.pop %v778
        %v780 = vmul.f32 %v778, %v779
        %v781 = vsub.f32 1.0, %v780
        %v782 = vmul.f32 %v779, %v781
        %v783 = vadd.f32 %v779, %v782
        %vm784 = vweird.f32 %v778
        %vm785 = vweird.f32 %v779
        %vm786 = vmor %vm784, %vm785
        %v787 = vsel %vm786, %v779, %v783
        %v788 = vand.u32 2147483647, %v778
        %vm789 = vcmp.eq.f32.partialorder %v788, 8.507059e+37
        %v790 = vand.u32 %v778, 2147483648
        %v791 = vor.u32 1.1754944e-38, %v790
        %v792 = vsel %vm789, %v791, %v787
        %v793 = vmul.f32 %v775, %v792
        %v794 = vmul.f32 %v793, %v765
        %v795 = vsel %vm466, %v794, 0.0
        %v796 = vrot.slane %v795, 4
        %v797 = vadd.f32 %v795, %v796
        %v798 = vrot.slane %v797, 2
        %v799 = vadd.f32 %v797, %v798
        %v800 = vrot.slane %v799, 1
        %v801 = vadd.f32 %v799, %v800
        %vm802 = vcmask 57344
        %803 = vst.msk [vmem:[%s416] sm:$0x1] %vm802, %v801
        %s804 = sand.u32 %s196, 1
        %s805 = scalar_lea.sflag [#allocation6], %s804
        %s806 = sand.u32 %s196, 1
        %s807 = smul.addr %s806, 8
        %s808 = scalar_lea.vmem [#allocation13], %s807
        %s809 = sand.u32 %s222, 1
        %s810 = scalar_lea.sflag [#allocation15], %s809
        %s811 = sand.u32 %s222, 1
        %s812 = scalar_lea.vmem [#allocation14], %s811
        // Predicated region
        $region69: #{tpu_custom_call.1} parent=47 // pred_check
          %p813 = pneg %p206
        $region70: #{tpu_custom_call.1} parent=47 // pred_check_branch
          %815 = sbr.rel (%p813) target = $region72
        $region71: #{tpu_custom_call.1} parent=47 // pred_region
          %817 = vsyncadd %s805, 0
          %s818 = smul.addr %s31, 8
          %s819 = scalar_lea.hbm %s7, %s818
          %s821 = sshll.u32 %s808, 4
          %s822 = int_to_ptr.vmem [resolvable:$true] %s821
          %s823 = sshll.u32 %s819, 4
          %s824 = int_to_ptr.hbm [resolvable:$true] %s823
          %826 = dma.vmem_to_hbm [thread:$0]  %s822, 128, %s824, %s805
        $region72: #{tpu_custom_call.1} parent=47 // pred_fallthru
          _
        // Predicated region
        $region73: #{tpu_custom_call.1} parent=47 // pred_check
          %p827 = pneg %p232
        $region74: #{tpu_custom_call.1} parent=47 // pred_check_branch
          %829 = sbr.rel (%p827) target = $region76
        $region75: #{tpu_custom_call.1} parent=47 // pred_region
          %831 = vsyncadd %s810, 0
          %s832 = scalar_lea.hbm %s8, %s31
          %s834 = sshll.u32 %s812, 4
          %s835 = int_to_ptr.vmem [resolvable:$true] %s834
          %s836 = sshll.u32 %s832, 4
          %s837 = int_to_ptr.hbm [resolvable:$true] %s836
          %839 = dma.vmem_to_hbm [thread:$0]  %s835, 16, %s837, %s810
        $region76: #{tpu_custom_call.1} parent=47 // pred_fallthru
          _
      $region48: #{tpu_custom_call.1} parent=5 // pred_fallthru
        _
      %p840 = scmp.le.s32.totalorder 2, %s26
      // Predicated region
      $region77: #{tpu_custom_call.1} parent=5 // pred_check
        %p841 = pneg %p840
      $region78: #{tpu_custom_call.1} parent=5 // pred_check_branch
        %843 = sbr.rel (%p841) target = $region80
      $region79: #{tpu_custom_call.1} parent=5 // pred_region
        %s844 = ssub.s32 %s26, 2
        // Predicated region
        $region81: #{tpu_custom_call.1} parent=79 // pred_check
          %p845 = pneg %p212
        $region82: #{tpu_custom_call.1} parent=79 // pred_check_branch
          %847 = sbr.rel (%p845) target = $region84
        $region83: #{tpu_custom_call.1} parent=79 // pred_region
          %s848 = sand.u32 %s197, 1
          %s849 = scalar_lea.sflag [#allocation6], %s848
          %s850 = sand.u32 %s197, 1
          %s851 = smul.addr %s850, 8
          %s852 = scalar_lea.vmem [#allocation13], %s851
          %854 = dma.done %s849, 128
        $region84: #{tpu_custom_call.1} parent=79 // pred_fallthru
          _
        // Predicated region
        $region85: #{tpu_custom_call.1} parent=79 // pred_check
          %p855 = pneg %p238
        $region86: #{tpu_custom_call.1} parent=79 // pred_check_branch
          %857 = sbr.rel (%p855) target = $region88
        $region87: #{tpu_custom_call.1} parent=79 // pred_region
          %s858 = sand.u32 %s223, 1
          %s859 = scalar_lea.sflag [#allocation15], %s858
          %s860 = sand.u32 %s223, 1
          %s861 = scalar_lea.vmem [#allocation14], %s860
          %863 = dma.done %s859, 16
        $region88: #{tpu_custom_call.1} parent=79 // pred_fallthru
          _
      $region80: #{tpu_custom_call.1} parent=5 // pred_fallthru
        _
    $region6: #{tpu_custom_call.1} parent=1 // loop_footer
      %s30 = sadd.s32 1, %s26
    $region7: #{tpu_custom_call.1} parent=1 // loop_footer_branch
      %25 = sbr.rel target = $region3
    $region8: #{tpu_custom_call.1} parent=1 // loop_exit
      _
    %864 = vsyncpa [#allocation5], 1
    %s865 = scalar_lea.sflag [#allocation5], 1
    %866 = vsyncpa %s865, 1
    %867 = vsyncpa [#allocation8], 1
    %868 = vsyncpa [#allocation11], 1
    %869 = vsyncpa [#allocation6], 1
    %s870 = scalar_lea.sflag [#allocation6], 1
    %871 = vsyncpa %s870, 1
    %872 = vsyncpa [#allocation15], 1
    %s873 = scalar_lea.sflag [#allocation15], 1
    %874 = vsyncpa %s873, 1

</llo_original>
